<compile_context>
chip_gen: v5e
topology: v5e:2x2
jax: 0.10.0
libtpu: 0.0.40
codegen_flags: <defaults>
</compile_context>

<pallas_src>
import functools
import math

import jax
import jax.numpy as jnp
from jax.experimental import pallas as pl
from jax.experimental.pallas import tpu as pltpu


def _round_up(x, m):
    return (x + m - 1) // m * m


def _timestep_embedder_kernel(t_ref, freqs_ref, w1_ref, b1_ref, w2_ref, b2_ref,
                              o_ref, emb_ref, *, half):
    # t_ref: (TN, 1) f32, freqs_ref: (1, half) f32 -> args kept in f32 (accuracy).
    args = t_ref[...] * freqs_ref[...]                       # (TN, half) f32

    # Write cos|sin into the lane-aligned VMEM scratch -> one K=2*half MXU dot
    # for Linear1 (fills the 256-deep MXU on v6e/v7x).
    emb_ref[:, :half] = jnp.cos(args).astype(emb_ref.dtype)
    emb_ref[:, half:] = jnp.sin(args).astype(emb_ref.dtype)

    # Linear1: f32 accumulation on the MXU, f32 bias add (lane-dense).
    h = jnp.dot(emb_ref[...], w1_ref[...], preferred_element_type=jnp.float32)
    h = h + b1_ref[...]

    # SiLU in f32 (sigmoid -> EUP slot, multiply -> VPU).
    h = h * jax.nn.sigmoid(h)

    # Linear2: f32 accumulation; single cast at the final store.
    out = jnp.dot(h.astype(w2_ref.dtype), w2_ref[...],
                  preferred_element_type=jnp.float32)
    out = out + b2_ref[...]
    o_ref[...] = out.astype(o_ref.dtype)


def prepare_timestep_embedder_params(w1, b1, w2, b2, *,
                                     frequency_embedding_size=256,
                                     max_period=10000,
                                     weight_dtype=jnp.bfloat16):
    """One-time (module-init) preprocessing: dtype cast, lane padding, freqs table.

    w1: (F, H), b1: (H,), w2: (H, H), b2: (H,)  (weights stored as (in, out)).
    """
    # TODO(synk): the reference's odd-dim zero-pad branch (dim % 2) is not
    # implemented; the module default (256) is even.
    assert frequency_embedding_size % 2 == 0, "odd frequency_embedding_size unsupported"
    half = frequency_embedding_size // 2
    hidden = w2.shape[1]
    assert w1.shape == (frequency_embedding_size, hidden)
    assert w2.shape == (hidden, hidden)
    weight_dtype = jnp.dtype(weight_dtype)

    # Lane-dense hidden dim (multiple of 128); padding is exact zeros so padded
    # columns stay zero through bias/SiLU/Linear2 and are sliced off (if at all).
    h_pad = _round_up(max(hidden, 128), 128)
    pad = h_pad - hidden

    freqs = jnp.exp(
        -math.log(max_period) * jnp.arange(half, dtype=jnp.float32) / half
    ).reshape(1, half)

    w1_p = w1.astype(weight_dtype)
    w2_p = w2.astype(weight_dtype)
    b1_p = b1.astype(jnp.float32).reshape(1, hidden)
    b2_p = b2.astype(jnp.float32).reshape(1, hidden)
    if pad:
        w1_p = jnp.pad(w1_p, ((0, 0), (0, pad)))
        w2_p = jnp.pad(w2_p, ((0, pad), (0, pad)))
        b1_p = jnp.pad(b1_p, ((0, 0), (0, pad)))
        b2_p = jnp.pad(b2_p, ((0, 0), (0, pad)))

    return dict(freqs=freqs, w1=w1_p, b1=b1_p, w2=w2_p, b2=b2_p,
                hidden=hidden, h_pad=h_pad, half=half,
                frequency_embedding_size=frequency_embedding_size,
                weight_dtype=weight_dtype)


def timestep_embedder(params, t, *, out_dtype=None):
    """t: (N,) float array.  Returns (N, hidden), matching TimestepEmbedder.forward."""
    n = t.shape[0]
    hidden = params["hidden"]
    h_pad = params["h_pad"]
    half = params["half"]
    fes = params["frequency_embedding_size"]
    weight_dtype = params["weight_dtype"]
    out_dtype = jnp.dtype(out_dtype) if out_dtype is not None else weight_dtype

    # Row tiling: one grid step for small batches (weights DMA'd exactly once, no
    # megacore duplication); tile_n = 256 for large batches (fills 256-row MXU).
    if n <= 256:
        tile_n = _round_up(max(n, 8), 8)
    else:
        tile_n = 256
    n_pad = _round_up(n, tile_n)
    num_tiles = n_pad // tile_n

    t2d = t.astype(jnp.float32).reshape(n, 1)
    if n_pad != n:
        t2d = jnp.pad(t2d, ((0, n_pad - n), (0, 0)))

    # Explicit scoped-VMEM budget (conservative: assumes double-buffered weights),
    # clamped to 64 MiB so it is valid on v5e/v6e (128 MiB) and v7x (64 MiB).
    wbytes = weight_dtype.itemsize
    obytes = out_dtype.itemsize
    weight_bytes = (fes * h_pad + h_pad * h_pad) * wbytes + 2 * h_pad * 4
    block_bytes = 2 * (tile_n * 4 + half * 4 + tile_n * h_pad * obytes)
    scratch_bytes = tile_n * fes * wbytes
    interm_bytes = 4 * tile_n * h_pad * 4
    needed = 2 * weight_bytes + block_bytes + scratch_bytes + interm_bytes
    vmem_limit = int(min(max(needed + (8 << 20), 32 << 20), 64 << 20))

    kernel = functools.partial(_timestep_embedder_kernel, half=half)

    def build(single_buffer_weights):
        if single_buffer_weights:
            # Grid-invariant blocks: one VMEM buffer is enough (halves weight VMEM).
            def wspec(shape):
                return pl.BlockSpec(shape, lambda i: (0, 0),
                                    pipeline_mode=pl.Buffered(1))
        else:
            def wspec(shape):
                return pl.BlockSpec(shape, lambda i: (0, 0))

        grid_spec = pltpu.PrefetchScalarGridSpec(
            num_scalar_prefetch=0,
            grid=(num_tiles,),
            in_specs=[
                pl.BlockSpec((tile_n, 1), lambda i: (i, 0)),   # t
                pl.BlockSpec((1, half), lambda i: (0, 0)),     # freqs
                wspec((fes, h_pad)),                           # W1 (resident)
                wspec((1, h_pad)),                             # b1
                wspec((h_pad, h_pad)),                         # W2 (resident)
                wspec((1, h_pad)),                             # b2
            ],
            out_specs=pl.BlockSpec((tile_n, h_pad), lambda i: (i, 0)),
            scratch_shapes=[pltpu.VMEM((tile_n, fes), weight_dtype)],  # cos|sin slab
        )
        return pl.pallas_call(
            kernel,
            out_shape=jax.ShapeDtypeStruct((n_pad, h_pad), out_dtype),
            grid_spec=grid_spec,
            compiler_params=pltpu.CompilerParams(
                # Megacore sharding only when there is actually >1 grid step.
                dimension_semantics=(("parallel",) if num_tiles > 1
                                     else ("arbitrary",)),
                vmem_limit_bytes=vmem_limit,
            ),
        )

    args = (t2d, params["freqs"], params["w1"], params["b1"],
            params["w2"], params["b2"])
    try:
        out = build(True)(*args)
    except Exception:
        # Fallback for jax versions where pipeline_mode=pl.Buffered(1) is not
        # supported by the TPU pallas_call pipeline; semantics are identical.
        out = build(False)(*args)

    # Conditional slice: skip the extra output round trip in the common case
    # (hidden % 128 == 0 and n % tile_n == 0).
    if n_pad == n and h_pad == hidden:
        return out
    return out[:n, :hidden]


def _reference(t, w1, b1, w2, b2, frequency_embedding_size=256, max_period=10000,
               weight_dtype=jnp.float32):
    """Pure-JAX reference; weight_dtype mimics the kernel's quantization points
    (no-op for f32) so the comparison isolates kernel correctness."""
    half = frequency_embedding_size // 2
    freqs = jnp.exp(
        -math.log(max_period) * jnp.arange(half, dtype=jnp.float32) / half
    )
    args = t.astype(jnp.float32)[:, None] * freqs[None]
    emb = jnp.concatenate([jnp.cos(args), jnp.sin(args)], axis=-1)
    embq = emb.astype(weight_dtype).astype(jnp.float32)
    w1q = w1.astype(weight_dtype).astype(jnp.float32)
    w2q = w2.astype(weight_dtype).astype(jnp.float32)
    h = embq @ w1q + b1.astype(jnp.float32)
    h = h * jax.nn.sigmoid(h)
    hq = h.astype(weight_dtype).astype(jnp.float32)
    return hq @ w2q + b2.astype(jnp.float32)


if __name__ == "__main__":
    key = jax.random.PRNGKey(0)
    ks = jax.random.split(key, 12)

    # ---- Case 1: small module-like shapes (hidden=32 -> padded hidden path). ----
    fes, hidden, n = 256, 32, 8
    t = jax.random.uniform(ks[0], (n,), jnp.float32) * 1000.0
    w1 = jax.random.normal(ks[1], (fes, hidden), jnp.float32) * 0.02
    b1 = jax.random.normal(ks[2], (hidden,), jnp.float32) * 0.02
    w2 = jax.random.normal(ks[3], (hidden, hidden), jnp.float32) * 0.02
    b2 = jax.random.normal(ks[4], (hidden,), jnp.float32) * 0.02

    # f32-weight path: tight comparison against the reference math.
    p_f32 = prepare_timestep_embedder_params(
        w1, b1, w2, b2, frequency_embedding_size=fes, weight_dtype=jnp.float32)
    out_f32 = jax.block_until_ready(timestep_embedder(p_f32, t, out_dtype=jnp.float32))
    ref_f32 = _reference(t, w1, b1, w2, b2, fes, weight_dtype=jnp.float32)
    assert out_f32.shape == (n, hidden)
    assert jnp.allclose(out_f32, ref_f32, atol=5e-4, rtol=1e-3), "f32 mismatch vs reference"

    # bf16-weight path (production default): bf16 weights, f32 accumulation, bf16 out.
    p_bf16 = prepare_timestep_embedder_params(
        w1, b1, w2, b2, frequency_embedding_size=fes, weight_dtype=jnp.bfloat16)
    out_bf16 = jax.block_until_ready(timestep_embedder(p_bf16, t))
    ref_bf16 = _reference(t, w1, b1, w2, b2, fes, weight_dtype=jnp.bfloat16)
    assert out_bf16.shape == (n, hidden)
    assert out_bf16.dtype == jnp.bfloat16
    assert jnp.allclose(out_bf16.astype(jnp.float32), ref_bf16,
                        atol=1e-2, rtol=2e-2), "bf16 mismatch vs reference"

    # ---- Case 2: hidden multiple of 128 and n multiple of tile_n ----
    # (no-pad / no-slice fast path, multi-step "parallel" grid, tile_n=256).
    hidden2, n2 = 128, 512
    t2 = jax.random.uniform(ks[5], (n2,), jnp.float32) * 1000.0
    w1b = jax.random.normal(ks[6], (fes, hidden2), jnp.float32) * 0.02
    b1b = jax.random.normal(ks[7], (hidden2,), jnp.float32) * 0.02
    w2b = jax.random.normal(ks[8], (hidden2, hidden2), jnp.float32) * 0.02
    b2b = jax.random.normal(ks[9], (hidden2,), jnp.float32) * 0.02

    p2 = prepare_timestep_embedder_params(
        w1b, b1b, w2b, b2b, frequency_embedding_size=fes, weight_dtype=jnp.bfloat16)
    out2 = jax.block_until_ready(timestep_embedder(p2, t2))
    ref2 = _reference(t2, w1b, b1b, w2b, b2b, fes, weight_dtype=jnp.bfloat16)
    assert out2.shape == (n2, hidden2)
    assert jnp.allclose(out2.astype(jnp.float32), ref2,
                        atol=1e-2, rtol=2e-2), "case-2 mismatch vs reference"

    print("KERNEL_OK")
</pallas_src>

<mosaic_0001>
module attributes {stable_mosaic.version = 11 : i64} {
  func.func @_timestep_embedder_kernel(%arg0: i32, %arg1: memref<8x1xf32, #tpu.memory_space<vmem>>, %arg2: memref<1x128xf32, #tpu.memory_space<vmem>>, %arg3: memref<256x128xf32, #tpu.memory_space<vmem>>, %arg4: memref<1x128xf32, #tpu.memory_space<vmem>>, %arg5: memref<128x128xf32, #tpu.memory_space<vmem>>, %arg6: memref<1x128xf32, #tpu.memory_space<vmem>>, %arg7: memref<8x128xf32, #tpu.memory_space<vmem>>, %arg8: memref<8x256xf32, #tpu.memory_space<vmem>>) attributes {dimension_semantics = [#tpu.dimension_semantics<arbitrary>], iteration_bounds = array<i64: 1>, scalar_prefetch = 0 : i64, scratch_operands = 1 : i64, tpu.core_type = #tpu.core_type<tc>, window_params = [{transform_indices = @transform_0, window_bounds = array<i64: 8, 1>}, {pipeline_mode = #tpu.pipeline_mode<synchronous>, transform_indices = @transform_1, window_bounds = array<i64: 1, 128>}, {pipeline_mode = #tpu.pipeline_mode<synchronous>, transform_indices = @transform_2, window_bounds = array<i64: 256, 128>}, {pipeline_mode = #tpu.pipeline_mode<synchronous>, transform_indices = @transform_3, window_bounds = array<i64: 1, 128>}, {pipeline_mode = #tpu.pipeline_mode<synchronous>, transform_indices = @transform_4, window_bounds = array<i64: 128, 128>}, {pipeline_mode = #tpu.pipeline_mode<synchronous>, transform_indices = @transform_5, window_bounds = array<i64: 1, 128>}, {transform_indices = @transform_6, window_bounds = array<i64: 8, 128>}]} {
    %c0 = arith.constant 0 : index
    %c0_0 = arith.constant 0 : index
    %0 = vector.load %arg1[%c0, %c0_0] : memref<8x1xf32, #tpu.memory_space<vmem>>, vector<8x1xf32>
    %c0_1 = arith.constant 0 : index
    %c0_2 = arith.constant 0 : index
    %1 = vector.load %arg2[%c0_1, %c0_2] : memref<1x128xf32, #tpu.memory_space<vmem>>, vector<1x128xf32>
    %2 = vector.broadcast %0 : vector<8x1xf32> to vector<8x128xf32>
    %3 = vector.broadcast %1 : vector<1x128xf32> to vector<8x128xf32>
    %4 = arith.mulf %2, %3 : vector<8x128xf32>
    %5 = math.cos %4 : vector<8x128xf32>
    %c0_3 = arith.constant 0 : index
    %c0_4 = arith.constant 0 : index
    %6 = vector.load %arg8[%c0_3, %c0_4] : memref<8x256xf32, #tpu.memory_space<vmem>>, vector<8x128xf32>
    tpu.vector_store %arg8[%c0_3, %c0_4], %5 {strides = array<i32>} : memref<8x256xf32, #tpu.memory_space<vmem>>, vector<8x128xf32>,
    %7 = math.sin %4 : vector<8x128xf32>
    %c0_5 = arith.constant 0 : index
    %c128 = arith.constant 128 : index
    %8 = vector.load %arg8[%c0_5, %c128] : memref<8x256xf32, #tpu.memory_space<vmem>>, vector<8x128xf32>
    tpu.vector_store %arg8[%c0_5, %c128], %7 {strides = array<i32>} : memref<8x256xf32, #tpu.memory_space<vmem>>, vector<8x128xf32>,
    %c0_6 = arith.constant 0 : index
    %c0_7 = arith.constant 0 : index
    %9 = vector.load %arg8[%c0_6, %c0_7] : memref<8x256xf32, #tpu.memory_space<vmem>>, vector<8x256xf32>
    %c0_8 = arith.constant 0 : index
    %c0_9 = arith.constant 0 : index
    %10 = vector.load %arg3[%c0_8, %c0_9] : memref<256x128xf32, #tpu.memory_space<vmem>>, vector<256x128xf32>
    %cst = arith.constant dense<0.000000e+00> : vector<8x128xf32>
    %11 = tpu.matmul %9, %10, %cst {dimension_numbers = #tpu.dot_dimension_numbers<[1], [0], [0], [1], [0, 0, 1, 1], [], []>} : vector<8x256xf32>, vector<256x128xf32>, vector<8x128xf32> -> vector<8x128xf32>
    %c0_10 = arith.constant 0 : index
    %c0_11 = arith.constant 0 : index
    %12 = vector.load %arg4[%c0_10, %c0_11] : memref<1x128xf32, #tpu.memory_space<vmem>>, vector<1x128xf32>
    %13 = vector.broadcast %12 : vector<1x128xf32> to vector<8x128xf32>
    %14 = arith.addf %11, %13 : vector<8x128xf32>
    %15 = arith.negf %14 : vector<8x128xf32>
    %16 = math.exp %15 : vector<8x128xf32>
    %cst_12 = arith.constant 1.000000e+00 : f32
    %17 = vector.broadcast %cst_12 : f32 to vector<8x128xf32>
    %18 = arith.addf %17, %16 : vector<8x128xf32>
    %19 = arith.divf %17, %18 : vector<8x128xf32>
    %20 = arith.mulf %14, %19 : vector<8x128xf32>
    %c0_13 = arith.constant 0 : index
    %c0_14 = arith.constant 0 : index
    %21 = vector.load %arg5[%c0_13, %c0_14] : memref<128x128xf32, #tpu.memory_space<vmem>>, vector<128x128xf32>
    %cst_15 = arith.constant dense<0.000000e+00> : vector<8x128xf32>
    %22 = tpu.matmul %20, %21, %cst_15 {dimension_numbers = #tpu.dot_dimension_numbers<[1], [0], [0], [1], [0, 0, 1, 1], [], []>} : vector<8x128xf32>, vector<128x128xf32>, vector<8x128xf32> -> vector<8x128xf32>
    %c0_16 = arith.constant 0 : index
    %c0_17 = arith.constant 0 : index
    %23 = vector.load %arg6[%c0_16, %c0_17] : memref<1x128xf32, #tpu.memory_space<vmem>>, vector<1x128xf32>
    %24 = vector.broadcast %23 : vector<1x128xf32> to vector<8x128xf32>
    %25 = arith.addf %22, %24 : vector<8x128xf32>
    %c0_18 = arith.constant 0 : index
    %c0_19 = arith.constant 0 : index
    %26 = vector.load %arg7[%c0_18, %c0_19] : memref<8x128xf32, #tpu.memory_space<vmem>>, vector<8x128xf32>
    tpu.vector_store %arg7[%c0_18, %c0_19], %25 {strides = array<i32>} : memref<8x128xf32, #tpu.memory_space<vmem>>, vector<8x128xf32>,
    return
  }
  func.func @transform_0(%arg0: i32) -> (i32, i32) {
    %c0_i32 = arith.constant 0 : i32
    %c0_i32_0 = arith.constant 0 : i32
    return %arg0, %c0_i32 : i32, i32
  }
  func.func @transform_1(%arg0: i32) -> (i32, i32) {
    %c0_i32 = arith.constant 0 : i32
    %c0_i32_0 = arith.constant 0 : i32
    %c0_i32_1 = arith.constant 0 : i32
    return %c0_i32, %c0_i32_0 : i32, i32
  }
  func.func @transform_2(%arg0: i32) -> (i32, i32) {
    %c0_i32 = arith.constant 0 : i32
    %c0_i32_0 = arith.constant 0 : i32
    %c0_i32_1 = arith.constant 0 : i32
    return %c0_i32, %c0_i32_0 : i32, i32
  }
  func.func @transform_3(%arg0: i32) -> (i32, i32) {
    %c0_i32 = arith.constant 0 : i32
    %c0_i32_0 = arith.constant 0 : i32
    %c0_i32_1 = arith.constant 0 : i32
    return %c0_i32, %c0_i32_0 : i32, i32
  }
  func.func @transform_4(%arg0: i32) -> (i32, i32) {
    %c0_i32 = arith.constant 0 : i32
    %c0_i32_0 = arith.constant 0 : i32
    %c0_i32_1 = arith.constant 0 : i32
    return %c0_i32, %c0_i32_0 : i32, i32
  }
  func.func @transform_5(%arg0: i32) -> (i32, i32) {
    %c0_i32 = arith.constant 0 : i32
    %c0_i32_0 = arith.constant 0 : i32
    %c0_i32_1 = arith.constant 0 : i32
    return %c0_i32, %c0_i32_0 : i32, i32
  }
  func.func @transform_6(%arg0: i32) -> (i32, i32) {
    %c0_i32 = arith.constant 0 : i32
    %c0_i32_0 = arith.constant 0 : i32
    return %arg0, %c0_i32 : i32, i32
  }
}

module attributes {stable_mosaic.version = 11 : i64} {
  func.func @_timestep_embedder_kernel(%arg0: i32, %arg1: memref<8x1xf32, #tpu.memory_space<vmem>>, %arg2: memref<1x128xf32, #tpu.memory_space<vmem>>, %arg3: memref<256x128xf32, #tpu.memory_space<vmem>>, %arg4: memref<1x128xf32, #tpu.memory_space<vmem>>, %arg5: memref<128x128xf32, #tpu.memory_space<vmem>>, %arg6: memref<1x128xf32, #tpu.memory_space<vmem>>, %arg7: memref<8x128xf32, #tpu.memory_space<vmem>>, %arg8: memref<8x256xf32, #tpu.memory_space<vmem>>) attributes {dimension_semantics = [#tpu.dimension_semantics<arbitrary>], iteration_bounds = array<i64: 1>, scalar_prefetch = 0 : i64, scratch_operands = 1 : i64, tpu.core_type = #tpu.core_type<tc>, window_params = [{transform_indices = @transform_0, window_bounds = array<i64: 8, 1>}, {pipeline_mode = #tpu.pipeline_mode<synchronous>, transform_indices = @transform_1, window_bounds = array<i64: 1, 128>}, {pipeline_mode = #tpu.pipeline_mode<synchronous>, transform_indices = @transform_2, window_bounds = array<i64: 256, 128>}, {pipeline_mode = #tpu.pipeline_mode<synchronous>, transform_indices = @transform_3, window_bounds = array<i64: 1, 128>}, {pipeline_mode = #tpu.pipeline_mode<synchronous>, transform_indices = @transform_4, window_bounds = array<i64: 128, 128>}, {pipeline_mode = #tpu.pipeline_mode<synchronous>, transform_indices = @transform_5, window_bounds = array<i64: 1, 128>}, {transform_indices = @transform_6, window_bounds = array<i64: 8, 128>}]} {
    %c0 = arith.constant 0 : index
    %c0_0 = arith.constant 0 : index
    %0 = vector.load %arg1[%c0, %c0_0] : memref<8x1xf32, #tpu.memory_space<vmem>>, vector<8x1xf32>
    %c0_1 = arith.constant 0 : index
    %c0_2 = arith.constant 0 : index
    %1 = vector.load %arg2[%c0_1, %c0_2] : memref<1x128xf32, #tpu.memory_space<vmem>>, vector<1x128xf32>
    %2 = vector.broadcast %0 : vector<8x1xf32> to vector<8x128xf32>
    %3 = vector.broadcast %1 : vector<1x128xf32> to vector<8x128xf32>
    %4 = arith.mulf %2, %3 : vector<8x128xf32>
    %5 = math.cos %4 : vector<8x128xf32>
    %c0_3 = arith.constant 0 : index
    %c0_4 = arith.constant 0 : index
    %6 = vector.load %arg8[%c0_3, %c0_4] : memref<8x256xf32, #tpu.memory_space<vmem>>, vector<8x128xf32>
    tpu.vector_store %arg8[%c0_3, %c0_4], %5 {strides = array<i32>} : memref<8x256xf32, #tpu.memory_space<vmem>>, vector<8x128xf32>,
    %7 = math.sin %4 : vector<8x128xf32>
    %c0_5 = arith.constant 0 : index
    %c128 = arith.constant 128 : index
    %8 = vector.load %arg8[%c0_5, %c128] : memref<8x256xf32, #tpu.memory_space<vmem>>, vector<8x128xf32>
    tpu.vector_store %arg8[%c0_5, %c128], %7 {strides = array<i32>} : memref<8x256xf32, #tpu.memory_space<vmem>>, vector<8x128xf32>,
    %c0_6 = arith.constant 0 : index
    %c0_7 = arith.constant 0 : index
    %9 = vector.load %arg8[%c0_6, %c0_7] : memref<8x256xf32, #tpu.memory_space<vmem>>, vector<8x256xf32>
    %c0_8 = arith.constant 0 : index
    %c0_9 = arith.constant 0 : index
    %10 = vector.load %arg3[%c0_8, %c0_9] : memref<256x128xf32, #tpu.memory_space<vmem>>, vector<256x128xf32>
    %cst = arith.constant dense<0.000000e+00> : vector<8x128xf32>
    %11 = tpu.matmul %9, %10, %cst {dimension_numbers = #tpu.dot_dimension_numbers<[1], [0], [0], [1], [0, 0, 1, 1], [], []>} : vector<8x256xf32>, vector<256x128xf32>, vector<8x128xf32> -> vector<8x128xf32>
    %c0_10 = arith.constant 0 : index
    %c0_11 = arith.constant 0 : index
    %12 = vector.load %arg4[%c0_10, %c0_11] : memref<1x128xf32, #tpu.memory_space<vmem>>, vector<1x128xf32>
    %13 = vector.broadcast %12 : vector<1x128xf32> to vector<8x128xf32>
    %14 = arith.addf %11, %13 : vector<8x128xf32>
    %15 = arith.negf %14 : vector<8x128xf32>
    %16 = math.exp %15 : vector<8x128xf32>
    %cst_12 = arith.constant 1.000000e+00 : f32
    %17 = vector.broadcast %cst_12 : f32 to vector<8x128xf32>
    %18 = arith.addf %17, %16 : vector<8x128xf32>
    %19 = arith.divf %17, %18 : vector<8x128xf32>
    %20 = arith.mulf %14, %19 : vector<8x128xf32>
    %c0_13 = arith.constant 0 : index
    %c0_14 = arith.constant 0 : index
    %21 = vector.load %arg5[%c0_13, %c0_14] : memref<128x128xf32, #tpu.memory_space<vmem>>, vector<128x128xf32>
    %cst_15 = arith.constant dense<0.000000e+00> : vector<8x128xf32>
    %22 = tpu.matmul %20, %21, %cst_15 {dimension_numbers = #tpu.dot_dimension_numbers<[1], [0], [0], [1], [0, 0, 1, 1], [], []>} : vector<8x128xf32>, vector<128x128xf32>, vector<8x128xf32> -> vector<8x128xf32>
    %c0_16 = arith.constant 0 : index
    %c0_17 = arith.constant 0 : index
    %23 = vector.load %arg6[%c0_16, %c0_17] : memref<1x128xf32, #tpu.memory_space<vmem>>, vector<1x128xf32>
    %24 = vector.broadcast %23 : vector<1x128xf32> to vector<8x128xf32>
    %25 = arith.addf %22, %24 : vector<8x128xf32>
    %c0_18 = arith.constant 0 : index
    %c0_19 = arith.constant 0 : index
    %26 = vector.load %arg7[%c0_18, %c0_19] : memref<8x128xf32, #tpu.memory_space<vmem>>, vector<8x128xf32>
    tpu.vector_store %arg7[%c0_18, %c0_19], %25 {strides = array<i32>} : memref<8x128xf32, #tpu.memory_space<vmem>>, vector<8x128xf32>,
    return
  }
  func.func @transform_0(%arg0: i32) -> (i32, i32) {
    %c0_i32 = arith.constant 0 : i32
    %c0_i32_0 = arith.constant 0 : i32
    return %arg0, %c0_i32 : i32, i32
  }
  func.func @transform_1(%arg0: i32) -> (i32, i32) {
    %c0_i32 = arith.constant 0 : i32
    %c0_i32_0 = arith.constant 0 : i32
    %c0_i32_1 = arith.constant 0 : i32
    return %c0_i32, %c0_i32_0 : i32, i32
  }
  func.func @transform_2(%arg0: i32) -> (i32, i32) {
    %c0_i32 = arith.constant 0 : i32
    %c0_i32_0 = arith.constant 0 : i32
    %c0_i32_1 = arith.constant 0 : i32
    return %c0_i32, %c0_i32_0 : i32, i32
  }
  func.func @transform_3(%arg0: i32) -> (i32, i32) {
    %c0_i32 = arith.constant 0 : i32
    %c0_i32_0 = arith.constant 0 : i32
    %c0_i32_1 = arith.constant 0 : i32
    return %c0_i32, %c0_i32_0 : i32, i32
  }
  func.func @transform_4(%arg0: i32) -> (i32, i32) {
    %c0_i32 = arith.constant 0 : i32
    %c0_i32_0 = arith.constant 0 : i32
    %c0_i32_1 = arith.constant 0 : i32
    return %c0_i32, %c0_i32_0 : i32, i32
  }
  func.func @transform_5(%arg0: i32) -> (i32, i32) {
    %c0_i32 = arith.constant 0 : i32
    %c0_i32_0 = arith.constant 0 : i32
    %c0_i32_1 = arith.constant 0 : i32
    return %c0_i32, %c0_i32_0 : i32, i32
  }
  func.func @transform_6(%arg0: i32) -> (i32, i32) {
    %c0_i32 = arith.constant 0 : i32
    %c0_i32_0 = arith.constant 0 : i32
    return %arg0, %c0_i32 : i32, i32
  }
}

</mosaic_0001>

<llo_original>
// kernel: tpu_custom_call.1
$region0: #{tpu_custom_call.1}
  #allocation0 [shape = 'u32[]', space=smem, size = 0x4, offset = 0x4, fixed_abs, tag = 'smem constant byte address 0x4 - core index']
  #allocation1 [shape = 'u32[72,128]{1,0:T(1,128)}', space=vmem, size = 0x9000, scoped, tag = 'internal scratch']
  #allocation2 [shape = 'f32[8,256]{1,0:T(8,128)}', space=vmem, size = 0x2000, scoped, tag = 'scratch operand']
  %s0 = inlined_call_operand.vmem [shape: f32[8,1], index: 0, kind: input, shape index: {}]
  %s1 = inlined_call_operand.vmem [shape: f32[1,128], index: 1, kind: input, shape index: {}]
  %s2 = inlined_call_operand.hbm [shape: f32[256,128], index: 2, kind: input, shape index: {}]
  %s3 = inlined_call_operand.vmem [shape: f32[1,128], index: 3, kind: input, shape index: {}]
  %s4 = inlined_call_operand.hbm [shape: f32[128,128], index: 4, kind: input, shape index: {}]
  %s5 = inlined_call_operand.vmem [shape: f32[1,128], index: 5, kind: input, shape index: {}]
  %s6 = inlined_call_operand.hbm [shape: f32[8,128], index: 6, kind: output, shape index: {}]
  %s7 = sld [smem:[#allocation0]]
  $region42: #{tpu_custom_call.1} parent=0
    _
  %s9 = ssub.s32 1, %s7
  %s10 = scalar_select 0, %s9, %s7
  $region1: #{tpu_custom_call.1} parent=0
    #allocation3 [shape = 'u8[131072]{0}', space=vmem, size = 0x20000, scoped, tag = 'input window, operand 2, single buffered']
    #allocation4 [shape = 's32[1]{0}', space=sflag, size = 0x4, scoped, tag = 'scoped memory for tpu_custom_call.1']
    #allocation5 [shape = 's32[1]{0}', space=sflag, size = 0x4, scoped, tag = 'scoped memory for tpu_custom_call.1']
    #allocation6 [shape = 'u8[65536]{0}', space=vmem, size = 0x10000, scoped, tag = 'input window, operand 4, single buffered']
    #allocation7 [shape = 's32[1]{0}', space=sflag, size = 0x4, scoped, tag = 'scoped memory for tpu_custom_call.1']
    #allocation8 [shape = 'u8[4096]{0}', space=vmem, size = 0x1000, scoped, tag = 'output window, operand 0, single buffered']
    %11 = vsyncpa [#allocation4], 0
    %12 = vsyncpa [#allocation7], 0
    %13 = vsyncpa [#allocation5], 0
    // Predicated region
    $region2: #{tpu_custom_call.1} parent=1 // pred_check
      _
    $region3: #{tpu_custom_call.1} parent=1 // pred_check_branch
      %15 = sbr.rel (0) target = $region5
    $region4: #{tpu_custom_call.1} parent=1 // pred_region
      _
    $region5: #{tpu_custom_call.1} parent=1 // pred_fallthru
      _
    // Predicated region
    $region6: #{tpu_custom_call.1} parent=1 // pred_check
      _
    $region7: #{tpu_custom_call.1} parent=1 // pred_check_branch
      %17 = sbr.rel (0) target = $region9
    $region8: #{tpu_custom_call.1} parent=1 // pred_region
      _
    $region9: #{tpu_custom_call.1} parent=1 // pred_fallthru
      _
    // Predicated region
    $region10: #{tpu_custom_call.1} parent=1 // pred_check
      _
    $region11: #{tpu_custom_call.1} parent=1 // pred_check_branch
      %19 = sbr.rel (0) target = $region13
    $region12: #{tpu_custom_call.1} parent=1 // pred_region
      %21 = vsyncadd [#allocation4], 0
      %s22 = sshll.u32 %s2, 4
      %s23 = int_to_ptr.hbm [resolvable:$true] %s22
      %s24 = sshll.u32 [#allocation3], 4
      %s25 = int_to_ptr.vmem [resolvable:$true] %s24
      %30 = dma.hbm_to_vmem [thread:$0]  %s23, 4096, %s25, [#allocation4], 128, 128, 8
    $region13: #{tpu_custom_call.1} parent=1 // pred_fallthru
      _
    // Predicated region
    $region14: #{tpu_custom_call.1} parent=1 // pred_check
      _
    $region15: #{tpu_custom_call.1} parent=1 // pred_check_branch
      %32 = sbr.rel (0) target = $region17
    $region16: #{tpu_custom_call.1} parent=1 // pred_region
      _
    $region17: #{tpu_custom_call.1} parent=1 // pred_fallthru
      _
    // Predicated region
    $region18: #{tpu_custom_call.1} parent=1 // pred_check
      _
    $region19: #{tpu_custom_call.1} parent=1 // pred_check_branch
      %34 = sbr.rel (0) target = $region21
    $region20: #{tpu_custom_call.1} parent=1 // pred_region
      %36 = vsyncadd [#allocation7], 0
      %s37 = sshll.u32 %s4, 4
      %s38 = int_to_ptr.hbm [resolvable:$true] %s37
      %s39 = sshll.u32 [#allocation6], 4
      %s40 = int_to_ptr.vmem [resolvable:$true] %s39
      %45 = dma.hbm_to_vmem [thread:$0]  %s38, 2048, %s40, [#allocation7], 128, 128, 8
    $region21: #{tpu_custom_call.1} parent=1 // pred_fallthru
      _
    // Predicated region
    $region22: #{tpu_custom_call.1} parent=1 // pred_check
      _
    $region23: #{tpu_custom_call.1} parent=1 // pred_check_branch
      %47 = sbr.rel (0) target = $region25
    $region24: #{tpu_custom_call.1} parent=1 // pred_region
      _
    $region25: #{tpu_custom_call.1} parent=1 // pred_fallthru
      _
    // Predicated region
    $region26: #{tpu_custom_call.1} parent=1 // pred_check
      _
    $region27: #{tpu_custom_call.1} parent=1 // pred_check_branch
      %49 = sbr.rel (0) target = $region29
    $region28: #{tpu_custom_call.1} parent=1 // pred_region
      %51 = dma.done [#allocation4], 4096
    $region29: #{tpu_custom_call.1} parent=1 // pred_fallthru
      _
    // Predicated region
    $region30: #{tpu_custom_call.1} parent=1 // pred_check
      _
    $region31: #{tpu_custom_call.1} parent=1 // pred_check_branch
      %53 = sbr.rel (0) target = $region33
    $region32: #{tpu_custom_call.1} parent=1 // pred_region
      %55 = dma.done [#allocation7], 2048
    $region33: #{tpu_custom_call.1} parent=1 // pred_fallthru
      _
    %v56 = vld [vmem:[%s0] sm:$0xff]
    %v57 = vld [vmem:[%s1] sm:$0x1]
    %59 = vset.pattern.permute.xlu0 0
    %60 = vperm.xlu0 %59, %v56
    %v61 = vpop.permute.xlu0 %60
    %v64 = vperm.slane %v57, 0
    %v66 = vmul.f32 %v61, %v64
    %v67 = vand.u32 2147483647, %v66
    %vm68 = vcmp.le.f32.partialorder %v67, 0.7853982
    %vm69 = vcmp.lt.s32.totalorder %v66, 0
    %v70 = vand.u32 %v66, 2139095040
    %v71 = vshrl.u32 %v70, 23
    %v72 = vsub.s32 %v71, 127
    %v73 = vand.u32 2147483647, %v66
    %v74 = vand.u32 %v73, 8388607
    %v75 = vor.u32 %v74, 8388608
    %v76 = vsub.s32 0, %v75
    %v77 = vadd.s32 %v72, 1
    %vm78 = vcmp.gt.s32.totalorder %v77, 0
    %v79 = vsel %vm78, %v77, 0
    %v80 = vshrl.u32 %v79, 5
    %v81 = vand.u32 %v79, 31
    %v82 = vsub.s32 32, %v81
    %v83 = vshrl.u32 683565275, %v82
    %v84 = vshll.u32 683565275, %v81
    %v85 = vshrl.u32 2475754826, %v82
    %v86 = vor.u32 %v84, %v85
    %v87 = vshll.u32 2475754826, %v81
    %v88 = vshrl.u32 2131351028, %v82
    %v89 = vor.u32 %v87, %v88
    %v90 = vshll.u32 2131351028, %v81
    %v91 = vshrl.u32 2102212464, %v82
    %v92 = vor.u32 %v90, %v91
    %v93 = vshll.u32 2102212464, %v81
    %v94 = vshrl.u32 920167782, %v82
    %v95 = vor.u32 %v93, %v94
    %v96 = vshll.u32 920167782, %v81
    %v97 = vshrl.u32 1326507024, %v82
    %v98 = vor.u32 %v96, %v97
    %vm99 = vcmp.lt.s32.totalorder %v80, 1
    %vm100 = vcmp.lt.s32.totalorder %v80, 2
    %vm101 = vcmp.lt.s32.totalorder %v80, 3
    %vm102 = vcmp.lt.s32.totalorder %v80, 4
    %v103 = vsel %vm99, %v83, %v86
    %v104 = vsel %vm102, %v92, 2102212464
    %v105 = vsel %vm101, %v89, %v104
    %v106 = vsel %vm100, %v103, %v105
    %v107 = vsel %vm99, %v86, %v89
    %v108 = vsel %vm102, %v95, 920167782
    %v109 = vsel %vm101, %v92, %v108
    %v110 = vsel %vm100, %v107, %v109
    %v111 = vsel %vm99, %v89, %v92
    %v112 = vsel %vm102, %v98, 1326507024
    %v113 = vsel %vm101, %v95, %v112
    %v114 = vsel %vm100, %v111, %v113
    %v115 = vshll.u32 %v75, 8
    %v116 = vand.u32 %v115, 65535
    %v117 = vshrl.u32 %v115, 16
    %v118 = vand.u32 %v114, 65535
    %v119 = vshrl.u32 %v114, 16
    %v120 = vmul.u32 %v116, %v118
    %v121 = vmul.u32 %v116, %v119
    %v122 = vmul.u32 %v117, %v118
    %v123 = vmul.u32 %v117, %v119
    %v124 = vshll.u32 %v121, 16
    %v125 = vshrl.u32 %v121, 16
    %v126 = vshll.u32 %v122, 16
    %v127 = vshrl.u32 %v122, 16
    %vm128 = vc.u32 %v120, %v124
    %v129 = vsel %vm128, 1, 0
    %v130 = vadd.s32 %v120, %v124
    %v131 = vadd.s32 %v123, %v129
    %vm132 = vc.u32 %v130, %v126
    %v133 = vsel %vm132, 1, 0
    %v134 = vadd.s32 %v130, %v126
    %v135 = vadd.s32 %v131, %v133
    %v136 = vadd.s32 %v135, %v125
    %v137 = vadd.s32 %v136, %v127
    %v138 = vand.u32 %v115, 65535
    %v139 = vshrl.u32 %v115, 16
    %v140 = vand.u32 %v110, 65535
    %v141 = vshrl.u32 %v110, 16
    %v142 = vmul.u32 %v138, %v140
    %v143 = vmul.u32 %v138, %v141
    %v144 = vmul.u32 %v139, %v140
    %v145 = vmul.u32 %v139, %v141
    %v146 = vshll.u32 %v143, 16
    %v147 = vshrl.u32 %v143, 16
    %v148 = vshll.u32 %v144, 16
    %v149 = vshrl.u32 %v144, 16
    %vm150 = vc.u32 %v142, %v146
    %v151 = vsel %vm150, 1, 0
    %v152 = vadd.s32 %v142, %v146
    %v153 = vadd.s32 %v145, %v151
    %vm154 = vc.u32 %v152, %v148
    %v155 = vsel %vm154, 1, 0
    %v156 = vadd.s32 %v152, %v148
    %v157 = vadd.s32 %v153, %v155
    %v158 = vadd.s32 %v157, %v147
    %v159 = vadd.s32 %v158, %v149
    %v160 = vmul.u32 %v115, %v106
    %v161 = vadd.s32 %v137, %v156
    %vm162 = vc.u32 %v137, %v156
    %v163 = vadd.s32 %v159, 1
    %v164 = vsel %vm162, %v163, %v159
    %v165 = vadd.s32 %v160, %v164
    %v166 = vadd.s32 %v165, 536870912
    %v167 = vshrl.u32 %v166, 30
    %v168 = vshll.u32 %v167, 30
    %v169 = vsub.s32 %v165, %v168
    %vm170 = vcmp.lt.s32.totalorder %v169, 0
    %v171 = vsub.s32 0, %v169
    %v172 = vsel %vm170, %v171, %v169
    %v173 = vclz %v172
    %v174 = vsub.s32 %v173, 2
    %vm175 = vcmp.gt.s32.totalorder 0, %v174
    %v176 = vsel %vm175, 0, %v174
    %v177 = vsub.s32 32, %v176
    %v178 = vshll.u32 %v169, %v176
    %v179 = vshrl.u32 %v161, %v177
    %v180 = vor.u32 %v178, %v179
    %v181 = vsub.s32 4294967266, %v176
    %v182 = vadd.s32 %v181, 127
    %v183 = vshll.u32 %v182, 23
    %v184 = vor.u32 4788187, %v183
    %v185 = vand.u32 2147483647, %v184
    %v187 = vcvt.s32.f32 %v180
    %v188 = vmul.f32 %v187, %v185
    %v189 = vxor.u32 %v188, 2147483648
    %v190 = vsel %vm69, %v189, %v188
    %v191 = vsub.s32 4, %v167
    %v192 = vsel %vm69, %v191, %v167
    %v193 = vsel %vm68, %v66, %v190
    %v194 = vsel %vm68, 0, %v192
    %v195 = vmul.f32 %v193, %v193
    %v196 = vmul.f32 %v195, -0.001358992
    %v197 = vadd.f32 %v196, 0.041655596
    %v198 = vmul.f32 %v195, %v197
    %v199 = vadd.f32 %v198, -0.4999988
    %v200 = vmul.f32 %v195, %v199
    %v201 = vadd.f32 1.0, %v200
    %v202 = vmul.f32 %v193, %v193
    %v203 = vmul.f32 %v202, -0.00019511016
    %v204 = vadd.f32 %v203, 0.008332121
    %v205 = vmul.f32 %v202, %v204
    %v206 = vadd.f32 %v205, -0.16666654
    %v207 = vmul.f32 %v202, %v206
    %v208 = vadd.f32 %v207, 1.0
    %v209 = vmul.f32 %v208, %v193
    %vm210 = vweird.f32 %v66
    %v211 = vand.u32 %v194, 3
    %vm212 = vcmp.lt.s32.totalorder %v211, 2
    %vm213 = vcmp.eq.s32.totalorder %v211, 0
    %v214 = vxor.u32 %v209, 2147483648
    %v215 = vsel %vm213, %v201, %v214
    %vm216 = vcmp.eq.s32.totalorder %v211, 2
    %v217 = vxor.u32 %v201, 2147483648
    %v218 = vsel %vm216, %v217, %v209
    %v219 = vsel %vm212, %v215, %v218
    %v220 = vsel %vm210, nan, %v219
    %221 = vst [vmem:[#allocation2] sm:$0xff] %v220
    %v222 = vand.u32 2147483647, %v66
    %vm223 = vcmp.le.f32.partialorder %v222, 0.7853982
    %vm224 = vcmp.lt.s32.totalorder %v66, 0
    %v225 = vand.u32 %v66, 2139095040
    %v226 = vshrl.u32 %v225, 23
    %v227 = vsub.s32 %v226, 127
    %v228 = vand.u32 2147483647, %v66
    %v229 = vand.u32 %v228, 8388607
    %v230 = vor.u32 %v229, 8388608
    %v231 = vsub.s32 0, %v230
    %v232 = vadd.s32 %v227, 1
    %vm233 = vcmp.gt.s32.totalorder %v232, 0
    %v234 = vsel %vm233, %v232, 0
    %v235 = vshrl.u32 %v234, 5
    %v236 = vand.u32 %v234, 31
    %v237 = vsub.s32 32, %v236
    %v238 = vshrl.u32 683565275, %v237
    %v239 = vshll.u32 683565275, %v236
    %v240 = vshrl.u32 2475754826, %v237
    %v241 = vor.u32 %v239, %v240
    %v242 = vshll.u32 2475754826, %v236
    %v243 = vshrl.u32 2131351028, %v237
    %v244 = vor.u32 %v242, %v243
    %v245 = vshll.u32 2131351028, %v236
    %v246 = vshrl.u32 2102212464, %v237
    %v247 = vor.u32 %v245, %v246
    %v248 = vshll.u32 2102212464, %v236
    %v249 = vshrl.u32 920167782, %v237
    %v250 = vor.u32 %v248, %v249
    %v251 = vshll.u32 920167782, %v236
    %v252 = vshrl.u32 1326507024, %v237
    %v253 = vor.u32 %v251, %v252
    %vm254 = vcmp.lt.s32.totalorder %v235, 1
    %vm255 = vcmp.lt.s32.totalorder %v235, 2
    %vm256 = vcmp.lt.s32.totalorder %v235, 3
    %vm257 = vcmp.lt.s32.totalorder %v235, 4
    %v258 = vsel %vm254, %v238, %v241
    %v259 = vsel %vm257, %v247, 2102212464
    %v260 = vsel %vm256, %v244, %v259
    %v261 = vsel %vm255, %v258, %v260
    %v262 = vsel %vm254, %v241, %v244
    %v263 = vsel %vm257, %v250, 920167782
    %v264 = vsel %vm256, %v247, %v263
    %v265 = vsel %vm255, %v262, %v264
    %v266 = vsel %vm254, %v244, %v247
    %v267 = vsel %vm257, %v253, 1326507024
    %v268 = vsel %vm256, %v250, %v267
    %v269 = vsel %vm255, %v266, %v268
    %v270 = vshll.u32 %v230, 8
    %v271 = vand.u32 %v270, 65535
    %v272 = vshrl.u32 %v270, 16
    %v273 = vand.u32 %v269, 65535
    %v274 = vshrl.u32 %v269, 16
    %v275 = vmul.u32 %v271, %v273
    %v276 = vmul.u32 %v271, %v274
    %v277 = vmul.u32 %v272, %v273
    %v278 = vmul.u32 %v272, %v274
    %v279 = vshll.u32 %v276, 16
    %v280 = vshrl.u32 %v276, 16
    %v281 = vshll.u32 %v277, 16
    %v282 = vshrl.u32 %v277, 16
    %vm283 = vc.u32 %v275, %v279
    %v284 = vsel %vm283, 1, 0
    %v285 = vadd.s32 %v275, %v279
    %v286 = vadd.s32 %v278, %v284
    %vm287 = vc.u32 %v285, %v281
    %v288 = vsel %vm287, 1, 0
    %v289 = vadd.s32 %v285, %v281
    %v290 = vadd.s32 %v286, %v288
    %v291 = vadd.s32 %v290, %v280
    %v292 = vadd.s32 %v291, %v282
    %v293 = vand.u32 %v270, 65535
    %v294 = vshrl.u32 %v270, 16
    %v295 = vand.u32 %v265, 65535
    %v296 = vshrl.u32 %v265, 16
    %v297 = vmul.u32 %v293, %v295
    %v298 = vmul.u32 %v293, %v296
    %v299 = vmul.u32 %v294, %v295
    %v300 = vmul.u32 %v294, %v296
    %v301 = vshll.u32 %v298, 16
    %v302 = vshrl.u32 %v298, 16
    %v303 = vshll.u32 %v299, 16
    %v304 = vshrl.u32 %v299, 16
    %vm305 = vc.u32 %v297, %v301
    %v306 = vsel %vm305, 1, 0
    %v307 = vadd.s32 %v297, %v301
    %v308 = vadd.s32 %v300, %v306
    %vm309 = vc.u32 %v307, %v303
    %v310 = vsel %vm309, 1, 0
    %v311 = vadd.s32 %v307, %v303
    %v312 = vadd.s32 %v308, %v310
    %v313 = vadd.s32 %v312, %v302
    %v314 = vadd.s32 %v313, %v304
    %v315 = vmul.u32 %v270, %v261
    %v316 = vadd.s32 %v292, %v311
    %vm317 = vc.u32 %v292, %v311
    %v318 = vadd.s32 %v314, 1
    %v319 = vsel %vm317, %v318, %v314
    %v320 = vadd.s32 %v315, %v319
    %v321 = vadd.s32 %v320, 536870912
    %v322 = vshrl.u32 %v321, 30
    %v323 = vshll.u32 %v322, 30
    %v324 = vsub.s32 %v320, %v323
    %vm325 = vcmp.lt.s32.totalorder %v324, 0
    %v326 = vsub.s32 0, %v324
    %v327 = vsel %vm325, %v326, %v324
    %v328 = vclz %v327
    %v329 = vsub.s32 %v328, 2
    %vm330 = vcmp.gt.s32.totalorder 0, %v329
    %v331 = vsel %vm330, 0, %v329
    %v332 = vsub.s32 32, %v331
    %v333 = vshll.u32 %v324, %v331
    %v334 = vshrl.u32 %v316, %v332
    %v335 = vor.u32 %v333, %v334
    %v336 = vsub.s32 4294967266, %v331
    %v337 = vadd.s32 %v336, 127
    %v338 = vshll.u32 %v337, 23
    %v339 = vor.u32 4788187, %v338
    %v340 = vand.u32 2147483647, %v339
    %v342 = vcvt.s32.f32 %v335
    %v343 = vmul.f32 %v342, %v340
    %v344 = vxor.u32 %v343, 2147483648
    %v345 = vsel %vm224, %v344, %v343
    %v346 = vsub.s32 4, %v322
    %v347 = vsel %vm224, %v346, %v322
    %v348 = vsel %vm223, %v66, %v345
    %v349 = vsel %vm223, 0, %v347
    %v350 = vmul.f32 %v348, %v348
    %v351 = vmul.f32 %v350, -0.001358992
    %v352 = vadd.f32 %v351, 0.041655596
    %v353 = vmul.f32 %v350, %v352
    %v354 = vadd.f32 %v353, -0.4999988
    %v355 = vmul.f32 %v350, %v354
    %v356 = vadd.f32 1.0, %v355
    %v357 = vmul.f32 %v348, %v348
    %v358 = vmul.f32 %v357, -0.00019511016
    %v359 = vadd.f32 %v358, 0.008332121
    %v360 = vmul.f32 %v357, %v359
    %v361 = vadd.f32 %v360, -0.16666654
    %v362 = vmul.f32 %v357, %v361
    %v363 = vadd.f32 %v362, 1.0
    %v364 = vmul.f32 %v363, %v348
    %vm365 = vweird.f32 %v66
    %v366 = vadd.s32 %v349, 3
    %v367 = vand.u32 %v366, 3
    %vm368 = vcmp.lt.s32.totalorder %v367, 2
    %vm369 = vcmp.eq.s32.totalorder %v367, 0
    %v370 = vxor.u32 %v364, 2147483648
    %v371 = vsel %vm369, %v356, %v370
    %vm372 = vcmp.eq.s32.totalorder %v367, 2
    %v373 = vxor.u32 %v356, 2147483648
    %v374 = vsel %vm372, %v373, %v364
    %v375 = vsel %vm368, %v371, %v374
    %v376 = vsel %vm365, nan, %v375
    %377 = vst [vmem:[#allocation2 + $0x8] sm:$0xff] %v376
    %v378 = vld [vmem:[#allocation2] sm:$0xff]
    %v379 = vld [vmem:[#allocation2 + $0x8] sm:$0xff]
    %v380 = vld [vmem:[#allocation3] sm:$0xff]
    %v381 = vld [vmem:[#allocation3 + $0x8] sm:$0xff]
    %v382 = vld [vmem:[#allocation3 + $0x10] sm:$0xff]
    %v383 = vld [vmem:[#allocation3 + $0x18] sm:$0xff]
    %v384 = vld [vmem:[#allocation3 + $0x20] sm:$0xff]
    %v385 = vld [vmem:[#allocation3 + $0x28] sm:$0xff]
    %v386 = vld [vmem:[#allocation3 + $0x30] sm:$0xff]
    %v387 = vld [vmem:[#allocation3 + $0x38] sm:$0xff]
    %v388 = vld [vmem:[#allocation3 + $0x40] sm:$0xff]
    %v389 = vld [vmem:[#allocation3 + $0x48] sm:$0xff]
    %v390 = vld [vmem:[#allocation3 + $0x50] sm:$0xff]
    %v391 = vld [vmem:[#allocation3 + $0x58] sm:$0xff]
    %v392 = vld [vmem:[#allocation3 + $0x60] sm:$0xff]
    %v393 = vld [vmem:[#allocation3 + $0x68] sm:$0xff]
    %v394 = vld [vmem:[#allocation3 + $0x70] sm:$0xff]
    %v395 = vld [vmem:[#allocation3 + $0x78] sm:$0xff]
    %v396 = vld [vmem:[#allocation3 + $0x80] sm:$0xff]
    %v397 = vld [vmem:[#allocation3 + $0x88] sm:$0xff]
    %v398 = vld [vmem:[#allocation3 + $0x90] sm:$0xff]
    %v399 = vld [vmem:[#allocation3 + $0x98] sm:$0xff]
    %v400 = vld [vmem:[#allocation3 + $0xa0] sm:$0xff]
    %v401 = vld [vmem:[#allocation3 + $0xa8] sm:$0xff]
    %v402 = vld [vmem:[#allocation3 + $0xb0] sm:$0xff]
    %v403 = vld [vmem:[#allocation3 + $0xb8] sm:$0xff]
    %v404 = vld [vmem:[#allocation3 + $0xc0] sm:$0xff]
    %v405 = vld [vmem:[#allocation3 + $0xc8] sm:$0xff]
    %v406 = vld [vmem:[#allocation3 + $0xd0] sm:$0xff]
    %v407 = vld [vmem:[#allocation3 + $0xd8] sm:$0xff]
    %v408 = vld [vmem:[#allocation3 + $0xe0] sm:$0xff]
    %v409 = vld [vmem:[#allocation3 + $0xe8] sm:$0xff]
    %v410 = vld [vmem:[#allocation3 + $0xf0] sm:$0xff]
    %v411 = vld [vmem:[#allocation3 + $0xf8] sm:$0xff]
    %v412 = vld [vmem:[%s3] sm:$0x1]
    %v414 = vperm.slane %v412, 0
    %416 = vmatpush.msra.mxu0 %v395
    %417 = vmatpush.msra.mxu0 %v394
    %418 = vmatpush.msra.mxu0 %v393
    %419 = vmatpush.msra.mxu0 %v392
    %420 = vmatpush.msra.mxu0 %v391
    %421 = vmatpush.msra.mxu0 %v390
    %422 = vmatpush.msra.mxu0 %v389
    %423 = vmatpush.msra.mxu0 %v388
    %424 = vmatpush.msra.mxu0 %v387
    %425 = vmatpush.msra.mxu0 %v386
    %426 = vmatpush.msra.mxu0 %v385
    %427 = vmatpush.msra.mxu0 %v384
    %428 = vmatpush.msra.mxu0 %v383
    %429 = vmatpush.msra.mxu0 %v382
    %430 = vmatpush.msra.mxu0 %v381
    %431 = vmatpush.msra.mxu0 %v380
    %432 = vmatmul.f32.gmra.mxu0 %v378
    %v433 = vpop.f32.mrf.mxu0
    %v434 = vadd.f32 %v414, %v433
    %435 = vdwg.mxu0
    %436 = vmatpush.msra.mxu0 %v411
    %437 = vmatpush.msra.mxu0 %v410
    %438 = vmatpush.msra.mxu0 %v409
    %439 = vmatpush.msra.mxu0 %v408
    %440 = vmatpush.msra.mxu0 %v407
    %441 = vmatpush.msra.mxu0 %v406
    %442 = vmatpush.msra.mxu0 %v405
    %443 = vmatpush.msra.mxu0 %v404
    %444 = vmatpush.msra.mxu0 %v403
    %445 = vmatpush.msra.mxu0 %v402
    %446 = vmatpush.msra.mxu0 %v401
    %447 = vmatpush.msra.mxu0 %v400
    %448 = vmatpush.msra.mxu0 %v399
    %449 = vmatpush.msra.mxu0 %v398
    %450 = vmatpush.msra.mxu0 %v397
    %451 = vmatpush.msra.mxu0 %v396
    %452 = vmatmul.f32.gmra.mxu0 %v379
    %v453 = vpop.f32.mrf.mxu0
    %v454 = vadd.f32 %v434, %v453
    %455 = vdwg.mxu0
    %v456 = vxor.u32 %v454, 2147483648
    %v457 = vmul.f32 %v456, 1.442695
    %v458 = vpow.pop %v457
    %v459 = vadd.f32 %v458, 1.0
    %v460 = vrcp.pop %v459
    %v461 = vmul.f32 %v459, %v460
    %v462 = vsub.f32 1.0, %v461
    %v463 = vmul.f32 %v460, %v462
    %v464 = vadd.f32 %v460, %v463
    %vm465 = vweird.f32 %v459
    %vm466 = vweird.f32 %v460
    %vm467 = vmor %vm465, %vm466
    %v468 = vsel %vm467, %v460, %v464
    %v469 = vand.u32 2147483647, %v459
    %vm470 = vcmp.eq.f32.partialorder %v469, 8.507059e+37
    %v471 = vand.u32 %v459, 2147483648
    %v472 = vor.u32 1.1754944e-38, %v471
    %v473 = vsel %vm470, %v472, %v468
    %v474 = vmul.f32 1.0, %v473
    %v475 = vmul.f32 %v454, %v474
    %v476 = vld [vmem:[#allocation6] sm:$0xff]
    %v477 = vld [vmem:[#allocation6 + $0x8] sm:$0xff]
    %v478 = vld [vmem:[#allocation6 + $0x10] sm:$0xff]
    %v479 = vld [vmem:[#allocation6 + $0x18] sm:$0xff]
    %v480 = vld [vmem:[#allocation6 + $0x20] sm:$0xff]
    %v481 = vld [vmem:[#allocation6 + $0x28] sm:$0xff]
    %v482 = vld [vmem:[#allocation6 + $0x30] sm:$0xff]
    %v483 = vld [vmem:[#allocation6 + $0x38] sm:$0xff]
    %v484 = vld [vmem:[#allocation6 + $0x40] sm:$0xff]
    %v485 = vld [vmem:[#allocation6 + $0x48] sm:$0xff]
    %v486 = vld [vmem:[#allocation6 + $0x50] sm:$0xff]
    %v487 = vld [vmem:[#allocation6 + $0x58] sm:$0xff]
    %v488 = vld [vmem:[#allocation6 + $0x60] sm:$0xff]
    %v489 = vld [vmem:[#allocation6 + $0x68] sm:$0xff]
    %v490 = vld [vmem:[#allocation6 + $0x70] sm:$0xff]
    %v491 = vld [vmem:[#allocation6 + $0x78] sm:$0xff]
    %v492 = vld [vmem:[%s5] sm:$0x1]
    %v494 = vperm.slane %v492, 0
    %496 = vmatpush.msra.mxu0 %v491
    %497 = vmatpush.msra.mxu0 %v490
    %498 = vmatpush.msra.mxu0 %v489
    %499 = vmatpush.msra.mxu0 %v488
    %500 = vmatpush.msra.mxu0 %v487
    %501 = vmatpush.msra.mxu0 %v486
    %502 = vmatpush.msra.mxu0 %v485
    %503 = vmatpush.msra.mxu0 %v484
    %504 = vmatpush.msra.mxu0 %v483
    %505 = vmatpush.msra.mxu0 %v482
    %506 = vmatpush.msra.mxu0 %v481
    %507 = vmatpush.msra.mxu0 %v480
    %508 = vmatpush.msra.mxu0 %v479
    %509 = vmatpush.msra.mxu0 %v478
    %510 = vmatpush.msra.mxu0 %v477
    %511 = vmatpush.msra.mxu0 %v476
    %512 = vmatmul.f32.gmra.mxu0 %v475
    %v513 = vpop.f32.mrf.mxu0
    %v514 = vadd.f32 %v494, %v513
    %515 = vdwg.mxu0
    %516 = vst [vmem:[#allocation8] sm:$0xff] %v514
    // Predicated region
    $region34: #{tpu_custom_call.1} parent=1 // pred_check
      _
    $region35: #{tpu_custom_call.1} parent=1 // pred_check_branch
      %518 = sbr.rel (0) target = $region37
    $region36: #{tpu_custom_call.1} parent=1 // pred_region
      %520 = vsyncadd [#allocation5], 0
      %s522 = sshll.u32 [#allocation8], 4
      %s523 = int_to_ptr.vmem [resolvable:$true] %s522
      %s524 = sshll.u32 %s6, 4
      %s525 = int_to_ptr.hbm [resolvable:$true] %s524
      %527 = dma.vmem_to_hbm [thread:$0]  %s523, 128, %s525, [#allocation5]
    $region37: #{tpu_custom_call.1} parent=1 // pred_fallthru
      _
    // Predicated region
    $region38: #{tpu_custom_call.1} parent=1 // pred_check
      _
    $region39: #{tpu_custom_call.1} parent=1 // pred_check_branch
      %529 = sbr.rel (0) target = $region41
    $region40: #{tpu_custom_call.1} parent=1 // pred_region
      %531 = dma.done [#allocation5], 128
    $region41: #{tpu_custom_call.1} parent=1 // pred_fallthru
      _
    %532 = vsyncpa [#allocation4], 1
    %533 = vsyncpa [#allocation7], 1
    %534 = vsyncpa [#allocation5], 1

// kernel: tpu_custom_call.1
$region0: #{tpu_custom_call.1}
  #allocation0 [shape = 'u32[]', space=smem, size = 0x4, offset = 0x4, fixed_abs, tag = 'smem constant byte address 0x4 - core index']
  #allocation1 [shape = 'u32[72,128]{1,0:T(1,128)}', space=vmem, size = 0x9000, scoped, tag = 'internal scratch']
  #allocation2 [shape = 'f32[8,256]{1,0:T(8,128)}', space=vmem, size = 0x2000, scoped, tag = 'scratch operand']
  %s0 = inlined_call_operand.vmem [shape: f32[8,1], index: 0, kind: input, shape index: {}]
  %s1 = inlined_call_operand.vmem [shape: f32[1,128], index: 1, kind: input, shape index: {}]
  %s2 = inlined_call_operand.hbm [shape: f32[256,128], index: 2, kind: input, shape index: {}]
  %s3 = inlined_call_operand.vmem [shape: f32[1,128], index: 3, kind: input, shape index: {}]
  %s4 = inlined_call_operand.hbm [shape: f32[128,128], index: 4, kind: input, shape index: {}]
  %s5 = inlined_call_operand.vmem [shape: f32[1,128], index: 5, kind: input, shape index: {}]
  %s6 = inlined_call_operand.hbm [shape: f32[8,128], index: 6, kind: output, shape index: {}]
  %s7 = sld [smem:[#allocation0]]
  $region42: #{tpu_custom_call.1} parent=0
    _
  %s9 = ssub.s32 1, %s7
  %s10 = scalar_select 0, %s9, %s7
  $region1: #{tpu_custom_call.1} parent=0
    #allocation3 [shape = 'u8[131072]{0}', space=vmem, size = 0x20000, scoped, tag = 'input window, operand 2, single buffered']
    #allocation4 [shape = 's32[1]{0}', space=sflag, size = 0x4, scoped, tag = 'scoped memory for tpu_custom_call.1']
    #allocation5 [shape = 's32[1]{0}', space=sflag, size = 0x4, scoped, tag = 'scoped memory for tpu_custom_call.1']
    #allocation6 [shape = 'u8[65536]{0}', space=vmem, size = 0x10000, scoped, tag = 'input window, operand 4, single buffered']
    #allocation7 [shape = 's32[1]{0}', space=sflag, size = 0x4, scoped, tag = 'scoped memory for tpu_custom_call.1']
    #allocation8 [shape = 'u8[4096]{0}', space=vmem, size = 0x1000, scoped, tag = 'output window, operand 0, single buffered']
    %11 = vsyncpa [#allocation4], 0
    %12 = vsyncpa [#allocation7], 0
    %13 = vsyncpa [#allocation5], 0
    // Predicated region
    $region2: #{tpu_custom_call.1} parent=1 // pred_check
      _
    $region3: #{tpu_custom_call.1} parent=1 // pred_check_branch
      %15 = sbr.rel (0) target = $region5
    $region4: #{tpu_custom_call.1} parent=1 // pred_region
      _
    $region5: #{tpu_custom_call.1} parent=1 // pred_fallthru
      _
    // Predicated region
    $region6: #{tpu_custom_call.1} parent=1 // pred_check
      _
    $region7: #{tpu_custom_call.1} parent=1 // pred_check_branch
      %17 = sbr.rel (0) target = $region9
    $region8: #{tpu_custom_call.1} parent=1 // pred_region
      _
    $region9: #{tpu_custom_call.1} parent=1 // pred_fallthru
      _
    // Predicated region
    $region10: #{tpu_custom_call.1} parent=1 // pred_check
      _
    $region11: #{tpu_custom_call.1} parent=1 // pred_check_branch
      %19 = sbr.rel (0) target = $region13
    $region12: #{tpu_custom_call.1} parent=1 // pred_region
      %21 = vsyncadd [#allocation4], 0
      %s22 = sshll.u32 %s2, 4
      %s23 = int_to_ptr.hbm [resolvable:$true] %s22
      %s24 = sshll.u32 [#allocation3], 4
      %s25 = int_to_ptr.vmem [resolvable:$true] %s24
      %30 = dma.hbm_to_vmem [thread:$0]  %s23, 4096, %s25, [#allocation4], 128, 128, 8
    $region13: #{tpu_custom_call.1} parent=1 // pred_fallthru
      _
    // Predicated region
    $region14: #{tpu_custom_call.1} parent=1 // pred_check
      _
    $region15: #{tpu_custom_call.1} parent=1 // pred_check_branch
      %32 = sbr.rel (0) target = $region17
    $region16: #{tpu_custom_call.1} parent=1 // pred_region
      _
    $region17: #{tpu_custom_call.1} parent=1 // pred_fallthru
      _
    // Predicated region
    $region18: #{tpu_custom_call.1} parent=1 // pred_check
      _
    $region19: #{tpu_custom_call.1} parent=1 // pred_check_branch
      %34 = sbr.rel (0) target = $region21
    $region20: #{tpu_custom_call.1} parent=1 // pred_region
      %36 = vsyncadd [#allocation7], 0
      %s37 = sshll.u32 %s4, 4
      %s38 = int_to_ptr.hbm [resolvable:$true] %s37
      %s39 = sshll.u32 [#allocation6], 4
      %s40 = int_to_ptr.vmem [resolvable:$true] %s39
      %45 = dma.hbm_to_vmem [thread:$0]  %s38, 2048, %s40, [#allocation7], 128, 128, 8
    $region21: #{tpu_custom_call.1} parent=1 // pred_fallthru
      _
    // Predicated region
    $region22: #{tpu_custom_call.1} parent=1 // pred_check
      _
    $region23: #{tpu_custom_call.1} parent=1 // pred_check_branch
      %47 = sbr.rel (0) target = $region25
    $region24: #{tpu_custom_call.1} parent=1 // pred_region
      _
    $region25: #{tpu_custom_call.1} parent=1 // pred_fallthru
      _
    // Predicated region
    $region26: #{tpu_custom_call.1} parent=1 // pred_check
      _
    $region27: #{tpu_custom_call.1} parent=1 // pred_check_branch
      %49 = sbr.rel (0) target = $region29
    $region28: #{tpu_custom_call.1} parent=1 // pred_region
      %51 = dma.done [#allocation4], 4096
    $region29: #{tpu_custom_call.1} parent=1 // pred_fallthru
      _
    // Predicated region
    $region30: #{tpu_custom_call.1} parent=1 // pred_check
      _
    $region31: #{tpu_custom_call.1} parent=1 // pred_check_branch
      %53 = sbr.rel (0) target = $region33
    $region32: #{tpu_custom_call.1} parent=1 // pred_region
      %55 = dma.done [#allocation7], 2048
    $region33: #{tpu_custom_call.1} parent=1 // pred_fallthru
      _
    %v56 = vld [vmem:[%s0] sm:$0xff]
    %v57 = vld [vmem:[%s1] sm:$0x1]
    %59 = vset.pattern.permute.xlu0 0
    %60 = vperm.xlu0 %59, %v56
    %v61 = vpop.permute.xlu0 %60
    %v64 = vperm.slane %v57, 0
    %v66 = vmul.f32 %v61, %v64
    %v67 = vand.u32 2147483647, %v66
    %vm68 = vcmp.le.f32.partialorder %v67, 0.7853982
    %vm69 = vcmp.lt.s32.totalorder %v66, 0
    %v70 = vand.u32 %v66, 2139095040
    %v71 = vshrl.u32 %v70, 23
    %v72 = vsub.s32 %v71, 127
    %v73 = vand.u32 2147483647, %v66
    %v74 = vand.u32 %v73, 8388607
    %v75 = vor.u32 %v74, 8388608
    %v76 = vsub.s32 0, %v75
    %v77 = vadd.s32 %v72, 1
    %vm78 = vcmp.gt.s32.totalorder %v77, 0
    %v79 = vsel %vm78, %v77, 0
    %v80 = vshrl.u32 %v79, 5
    %v81 = vand.u32 %v79, 31
    %v82 = vsub.s32 32, %v81
    %v83 = vshrl.u32 683565275, %v82
    %v84 = vshll.u32 683565275, %v81
    %v85 = vshrl.u32 2475754826, %v82
    %v86 = vor.u32 %v84, %v85
    %v87 = vshll.u32 2475754826, %v81
    %v88 = vshrl.u32 2131351028, %v82
    %v89 = vor.u32 %v87, %v88
    %v90 = vshll.u32 2131351028, %v81
    %v91 = vshrl.u32 2102212464, %v82
    %v92 = vor.u32 %v90, %v91
    %v93 = vshll.u32 2102212464, %v81
    %v94 = vshrl.u32 920167782, %v82
    %v95 = vor.u32 %v93, %v94
    %v96 = vshll.u32 920167782, %v81
    %v97 = vshrl.u32 1326507024, %v82
    %v98 = vor.u32 %v96, %v97
    %vm99 = vcmp.lt.s32.totalorder %v80, 1
    %vm100 = vcmp.lt.s32.totalorder %v80, 2
    %vm101 = vcmp.lt.s32.totalorder %v80, 3
    %vm102 = vcmp.lt.s32.totalorder %v80, 4
    %v103 = vsel %vm99, %v83, %v86
    %v104 = vsel %vm102, %v92, 2102212464
    %v105 = vsel %vm101, %v89, %v104
    %v106 = vsel %vm100, %v103, %v105
    %v107 = vsel %vm99, %v86, %v89
    %v108 = vsel %vm102, %v95, 920167782
    %v109 = vsel %vm101, %v92, %v108
    %v110 = vsel %vm100, %v107, %v109
    %v111 = vsel %vm99, %v89, %v92
    %v112 = vsel %vm102, %v98, 1326507024
    %v113 = vsel %vm101, %v95, %v112
    %v114 = vsel %vm100, %v111, %v113
    %v115 = vshll.u32 %v75, 8
    %v116 = vand.u32 %v115, 65535
    %v117 = vshrl.u32 %v115, 16
    %v118 = vand.u32 %v114, 65535
    %v119 = vshrl.u32 %v114, 16
    %v120 = vmul.u32 %v116, %v118
    %v121 = vmul.u32 %v116, %v119
    %v122 = vmul.u32 %v117, %v118
    %v123 = vmul.u32 %v117, %v119
    %v124 = vshll.u32 %v121, 16
    %v125 = vshrl.u32 %v121, 16
    %v126 = vshll.u32 %v122, 16
    %v127 = vshrl.u32 %v122, 16
    %vm128 = vc.u32 %v120, %v124
    %v129 = vsel %vm128, 1, 0
    %v130 = vadd.s32 %v120, %v124
    %v131 = vadd.s32 %v123, %v129
    %vm132 = vc.u32 %v130, %v126
    %v133 = vsel %vm132, 1, 0
    %v134 = vadd.s32 %v130, %v126
    %v135 = vadd.s32 %v131, %v133
    %v136 = vadd.s32 %v135, %v125
    %v137 = vadd.s32 %v136, %v127
    %v138 = vand.u32 %v115, 65535
    %v139 = vshrl.u32 %v115, 16
    %v140 = vand.u32 %v110, 65535
    %v141 = vshrl.u32 %v110, 16
    %v142 = vmul.u32 %v138, %v140
    %v143 = vmul.u32 %v138, %v141
    %v144 = vmul.u32 %v139, %v140
    %v145 = vmul.u32 %v139, %v141
    %v146 = vshll.u32 %v143, 16
    %v147 = vshrl.u32 %v143, 16
    %v148 = vshll.u32 %v144, 16
    %v149 = vshrl.u32 %v144, 16
    %vm150 = vc.u32 %v142, %v146
    %v151 = vsel %vm150, 1, 0
    %v152 = vadd.s32 %v142, %v146
    %v153 = vadd.s32 %v145, %v151
    %vm154 = vc.u32 %v152, %v148
    %v155 = vsel %vm154, 1, 0
    %v156 = vadd.s32 %v152, %v148
    %v157 = vadd.s32 %v153, %v155
    %v158 = vadd.s32 %v157, %v147
    %v159 = vadd.s32 %v158, %v149
    %v160 = vmul.u32 %v115, %v106
    %v161 = vadd.s32 %v137, %v156
    %vm162 = vc.u32 %v137, %v156
    %v163 = vadd.s32 %v159, 1
    %v164 = vsel %vm162, %v163, %v159
    %v165 = vadd.s32 %v160, %v164
    %v166 = vadd.s32 %v165, 536870912
    %v167 = vshrl.u32 %v166, 30
    %v168 = vshll.u32 %v167, 30
    %v169 = vsub.s32 %v165, %v168
    %vm170 = vcmp.lt.s32.totalorder %v169, 0
    %v171 = vsub.s32 0, %v169
    %v172 = vsel %vm170, %v171, %v169
    %v173 = vclz %v172
    %v174 = vsub.s32 %v173, 2
    %vm175 = vcmp.gt.s32.totalorder 0, %v174
    %v176 = vsel %vm175, 0, %v174
    %v177 = vsub.s32 32, %v176
    %v178 = vshll.u32 %v169, %v176
    %v179 = vshrl.u32 %v161, %v177
    %v180 = vor.u32 %v178, %v179
    %v181 = vsub.s32 4294967266, %v176
    %v182 = vadd.s32 %v181, 127
    %v183 = vshll.u32 %v182, 23
    %v184 = vor.u32 4788187, %v183
    %v185 = vand.u32 2147483647, %v184
    %v187 = vcvt.s32.f32 %v180
    %v188 = vmul.f32 %v187, %v185
    %v189 = vxor.u32 %v188, 2147483648
    %v190 = vsel %vm69, %v189, %v188
    %v191 = vsub.s32 4, %v167
    %v192 = vsel %vm69, %v191, %v167
    %v193 = vsel %vm68, %v66, %v190
    %v194 = vsel %vm68, 0, %v192
    %v195 = vmul.f32 %v193, %v193
    %v196 = vmul.f32 %v195, -0.001358992
    %v197 = vadd.f32 %v196, 0.041655596
    %v198 = vmul.f32 %v195, %v197
    %v199 = vadd.f32 %v198, -0.4999988
    %v200 = vmul.f32 %v195, %v199
    %v201 = vadd.f32 1.0, %v200
    %v202 = vmul.f32 %v193, %v193
    %v203 = vmul.f32 %v202, -0.00019511016
    %v204 = vadd.f32 %v203, 0.008332121
    %v205 = vmul.f32 %v202, %v204
    %v206 = vadd.f32 %v205, -0.16666654
    %v207 = vmul.f32 %v202, %v206
    %v208 = vadd.f32 %v207, 1.0
    %v209 = vmul.f32 %v208, %v193
    %vm210 = vweird.f32 %v66
    %v211 = vand.u32 %v194, 3
    %vm212 = vcmp.lt.s32.totalorder %v211, 2
    %vm213 = vcmp.eq.s32.totalorder %v211, 0
    %v214 = vxor.u32 %v209, 2147483648
    %v215 = vsel %vm213, %v201, %v214
    %vm216 = vcmp.eq.s32.totalorder %v211, 2
    %v217 = vxor.u32 %v201, 2147483648
    %v218 = vsel %vm216, %v217, %v209
    %v219 = vsel %vm212, %v215, %v218
    %v220 = vsel %vm210, nan, %v219
    %221 = vst [vmem:[#allocation2] sm:$0xff] %v220
    %v222 = vand.u32 2147483647, %v66
    %vm223 = vcmp.le.f32.partialorder %v222, 0.7853982
    %vm224 = vcmp.lt.s32.totalorder %v66, 0
    %v225 = vand.u32 %v66, 2139095040
    %v226 = vshrl.u32 %v225, 23
    %v227 = vsub.s32 %v226, 127
    %v228 = vand.u32 2147483647, %v66
    %v229 = vand.u32 %v228, 8388607
    %v230 = vor.u32 %v229, 8388608
    %v231 = vsub.s32 0, %v230
    %v232 = vadd.s32 %v227, 1
    %vm233 = vcmp.gt.s32.totalorder %v232, 0
    %v234 = vsel %vm233, %v232, 0
    %v235 = vshrl.u32 %v234, 5
    %v236 = vand.u32 %v234, 31
    %v237 = vsub.s32 32, %v236
    %v238 = vshrl.u32 683565275, %v237
    %v239 = vshll.u32 683565275, %v236
    %v240 = vshrl.u32 2475754826, %v237
    %v241 = vor.u32 %v239, %v240
    %v242 = vshll.u32 2475754826, %v236
    %v243 = vshrl.u32 2131351028, %v237
    %v244 = vor.u32 %v242, %v243
    %v245 = vshll.u32 2131351028, %v236
    %v246 = vshrl.u32 2102212464, %v237
    %v247 = vor.u32 %v245, %v246
    %v248 = vshll.u32 2102212464, %v236
    %v249 = vshrl.u32 920167782, %v237
    %v250 = vor.u32 %v248, %v249
    %v251 = vshll.u32 920167782, %v236
    %v252 = vshrl.u32 1326507024, %v237
    %v253 = vor.u32 %v251, %v252
    %vm254 = vcmp.lt.s32.totalorder %v235, 1
    %vm255 = vcmp.lt.s32.totalorder %v235, 2
    %vm256 = vcmp.lt.s32.totalorder %v235, 3
    %vm257 = vcmp.lt.s32.totalorder %v235, 4
    %v258 = vsel %vm254, %v238, %v241
    %v259 = vsel %vm257, %v247, 2102212464
    %v260 = vsel %vm256, %v244, %v259
    %v261 = vsel %vm255, %v258, %v260
    %v262 = vsel %vm254, %v241, %v244
    %v263 = vsel %vm257, %v250, 920167782
    %v264 = vsel %vm256, %v247, %v263
    %v265 = vsel %vm255, %v262, %v264
    %v266 = vsel %vm254, %v244, %v247
    %v267 = vsel %vm257, %v253, 1326507024
    %v268 = vsel %vm256, %v250, %v267
    %v269 = vsel %vm255, %v266, %v268
    %v270 = vshll.u32 %v230, 8
    %v271 = vand.u32 %v270, 65535
    %v272 = vshrl.u32 %v270, 16
    %v273 = vand.u32 %v269, 65535
    %v274 = vshrl.u32 %v269, 16
    %v275 = vmul.u32 %v271, %v273
    %v276 = vmul.u32 %v271, %v274
    %v277 = vmul.u32 %v272, %v273
    %v278 = vmul.u32 %v272, %v274
    %v279 = vshll.u32 %v276, 16
    %v280 = vshrl.u32 %v276, 16
    %v281 = vshll.u32 %v277, 16
    %v282 = vshrl.u32 %v277, 16
    %vm283 = vc.u32 %v275, %v279
    %v284 = vsel %vm283, 1, 0
    %v285 = vadd.s32 %v275, %v279
    %v286 = vadd.s32 %v278, %v284
    %vm287 = vc.u32 %v285, %v281
    %v288 = vsel %vm287, 1, 0
    %v289 = vadd.s32 %v285, %v281
    %v290 = vadd.s32 %v286, %v288
    %v291 = vadd.s32 %v290, %v280
    %v292 = vadd.s32 %v291, %v282
    %v293 = vand.u32 %v270, 65535
    %v294 = vshrl.u32 %v270, 16
    %v295 = vand.u32 %v265, 65535
    %v296 = vshrl.u32 %v265, 16
    %v297 = vmul.u32 %v293, %v295
    %v298 = vmul.u32 %v293, %v296
    %v299 = vmul.u32 %v294, %v295
    %v300 = vmul.u32 %v294, %v296
    %v301 = vshll.u32 %v298, 16
    %v302 = vshrl.u32 %v298, 16
    %v303 = vshll.u32 %v299, 16
    %v304 = vshrl.u32 %v299, 16
    %vm305 = vc.u32 %v297, %v301
    %v306 = vsel %vm305, 1, 0
    %v307 = vadd.s32 %v297, %v301
    %v308 = vadd.s32 %v300, %v306
    %vm309 = vc.u32 %v307, %v303
    %v310 = vsel %vm309, 1, 0
    %v311 = vadd.s32 %v307, %v303
    %v312 = vadd.s32 %v308, %v310
    %v313 = vadd.s32 %v312, %v302
    %v314 = vadd.s32 %v313, %v304
    %v315 = vmul.u32 %v270, %v261
    %v316 = vadd.s32 %v292, %v311
    %vm317 = vc.u32 %v292, %v311
    %v318 = vadd.s32 %v314, 1
    %v319 = vsel %vm317, %v318, %v314
    %v320 = vadd.s32 %v315, %v319
    %v321 = vadd.s32 %v320, 536870912
    %v322 = vshrl.u32 %v321, 30
    %v323 = vshll.u32 %v322, 30
    %v324 = vsub.s32 %v320, %v323
    %vm325 = vcmp.lt.s32.totalorder %v324, 0
    %v326 = vsub.s32 0, %v324
    %v327 = vsel %vm325, %v326, %v324
    %v328 = vclz %v327
    %v329 = vsub.s32 %v328, 2
    %vm330 = vcmp.gt.s32.totalorder 0, %v329
    %v331 = vsel %vm330, 0, %v329
    %v332 = vsub.s32 32, %v331
    %v333 = vshll.u32 %v324, %v331
    %v334 = vshrl.u32 %v316, %v332
    %v335 = vor.u32 %v333, %v334
    %v336 = vsub.s32 4294967266, %v331
    %v337 = vadd.s32 %v336, 127
    %v338 = vshll.u32 %v337, 23
    %v339 = vor.u32 4788187, %v338
    %v340 = vand.u32 2147483647, %v339
    %v342 = vcvt.s32.f32 %v335
    %v343 = vmul.f32 %v342, %v340
    %v344 = vxor.u32 %v343, 2147483648
    %v345 = vsel %vm224, %v344, %v343
    %v346 = vsub.s32 4, %v322
    %v347 = vsel %vm224, %v346, %v322
    %v348 = vsel %vm223, %v66, %v345
    %v349 = vsel %vm223, 0, %v347
    %v350 = vmul.f32 %v348, %v348
    %v351 = vmul.f32 %v350, -0.001358992
    %v352 = vadd.f32 %v351, 0.041655596
    %v353 = vmul.f32 %v350, %v352
    %v354 = vadd.f32 %v353, -0.4999988
    %v355 = vmul.f32 %v350, %v354
    %v356 = vadd.f32 1.0, %v355
    %v357 = vmul.f32 %v348, %v348
    %v358 = vmul.f32 %v357, -0.00019511016
    %v359 = vadd.f32 %v358, 0.008332121
    %v360 = vmul.f32 %v357, %v359
    %v361 = vadd.f32 %v360, -0.16666654
    %v362 = vmul.f32 %v357, %v361
    %v363 = vadd.f32 %v362, 1.0
    %v364 = vmul.f32 %v363, %v348
    %vm365 = vweird.f32 %v66
    %v366 = vadd.s32 %v349, 3
    %v367 = vand.u32 %v366, 3
    %vm368 = vcmp.lt.s32.totalorder %v367, 2
    %vm369 = vcmp.eq.s32.totalorder %v367, 0
    %v370 = vxor.u32 %v364, 2147483648
    %v371 = vsel %vm369, %v356, %v370
    %vm372 = vcmp.eq.s32.totalorder %v367, 2
    %v373 = vxor.u32 %v356, 2147483648
    %v374 = vsel %vm372, %v373, %v364
    %v375 = vsel %vm368, %v371, %v374
    %v376 = vsel %vm365, nan, %v375
    %377 = vst [vmem:[#allocation2 + $0x8] sm:$0xff] %v376
    %v378 = vld [vmem:[#allocation2] sm:$0xff]
    %v379 = vld [vmem:[#allocation2 + $0x8] sm:$0xff]
    %v380 = vld [vmem:[#allocation3] sm:$0xff]
    %v381 = vld [vmem:[#allocation3 + $0x8] sm:$0xff]
    %v382 = vld [vmem:[#allocation3 + $0x10] sm:$0xff]
    %v383 = vld [vmem:[#allocation3 + $0x18] sm:$0xff]
    %v384 = vld [vmem:[#allocation3 + $0x20] sm:$0xff]
    %v385 = vld [vmem:[#allocation3 + $0x28] sm:$0xff]
    %v386 = vld [vmem:[#allocation3 + $0x30] sm:$0xff]
    %v387 = vld [vmem:[#allocation3 + $0x38] sm:$0xff]
    %v388 = vld [vmem:[#allocation3 + $0x40] sm:$0xff]
    %v389 = vld [vmem:[#allocation3 + $0x48] sm:$0xff]
    %v390 = vld [vmem:[#allocation3 + $0x50] sm:$0xff]
    %v391 = vld [vmem:[#allocation3 + $0x58] sm:$0xff]
    %v392 = vld [vmem:[#allocation3 + $0x60] sm:$0xff]
    %v393 = vld [vmem:[#allocation3 + $0x68] sm:$0xff]
    %v394 = vld [vmem:[#allocation3 + $0x70] sm:$0xff]
    %v395 = vld [vmem:[#allocation3 + $0x78] sm:$0xff]
    %v396 = vld [vmem:[#allocation3 + $0x80] sm:$0xff]
    %v397 = vld [vmem:[#allocation3 + $0x88] sm:$0xff]
    %v398 = vld [vmem:[#allocation3 + $0x90] sm:$0xff]
    %v399 = vld [vmem:[#allocation3 + $0x98] sm:$0xff]
    %v400 = vld [vmem:[#allocation3 + $0xa0] sm:$0xff]
    %v401 = vld [vmem:[#allocation3 + $0xa8] sm:$0xff]
    %v402 = vld [vmem:[#allocation3 + $0xb0] sm:$0xff]
    %v403 = vld [vmem:[#allocation3 + $0xb8] sm:$0xff]
    %v404 = vld [vmem:[#allocation3 + $0xc0] sm:$0xff]
    %v405 = vld [vmem:[#allocation3 + $0xc8] sm:$0xff]
    %v406 = vld [vmem:[#allocation3 + $0xd0] sm:$0xff]
    %v407 = vld [vmem:[#allocation3 + $0xd8] sm:$0xff]
    %v408 = vld [vmem:[#allocation3 + $0xe0] sm:$0xff]
    %v409 = vld [vmem:[#allocation3 + $0xe8] sm:$0xff]
    %v410 = vld [vmem:[#allocation3 + $0xf0] sm:$0xff]
    %v411 = vld [vmem:[#allocation3 + $0xf8] sm:$0xff]
    %v412 = vld [vmem:[%s3] sm:$0x1]
    %v414 = vperm.slane %v412, 0
    %416 = vmatpush.msra.mxu0 %v395
    %417 = vmatpush.msra.mxu0 %v394
    %418 = vmatpush.msra.mxu0 %v393
    %419 = vmatpush.msra.mxu0 %v392
    %420 = vmatpush.msra.mxu0 %v391
    %421 = vmatpush.msra.mxu0 %v390
    %422 = vmatpush.msra.mxu0 %v389
    %423 = vmatpush.msra.mxu0 %v388
    %424 = vmatpush.msra.mxu0 %v387
    %425 = vmatpush.msra.mxu0 %v386
    %426 = vmatpush.msra.mxu0 %v385
    %427 = vmatpush.msra.mxu0 %v384
    %428 = vmatpush.msra.mxu0 %v383
    %429 = vmatpush.msra.mxu0 %v382
    %430 = vmatpush.msra.mxu0 %v381
    %431 = vmatpush.msra.mxu0 %v380
    %432 = vmatmul.f32.gmra.mxu0 %v378
    %v433 = vpop.f32.mrf.mxu0
    %v434 = vadd.f32 %v414, %v433
    %435 = vdwg.mxu0
    %436 = vmatpush.msra.mxu0 %v411
    %437 = vmatpush.msra.mxu0 %v410
    %438 = vmatpush.msra.mxu0 %v409
    %439 = vmatpush.msra.mxu0 %v408
    %440 = vmatpush.msra.mxu0 %v407
    %441 = vmatpush.msra.mxu0 %v406
    %442 = vmatpush.msra.mxu0 %v405
    %443 = vmatpush.msra.mxu0 %v404
    %444 = vmatpush.msra.mxu0 %v403
    %445 = vmatpush.msra.mxu0 %v402
    %446 = vmatpush.msra.mxu0 %v401
    %447 = vmatpush.msra.mxu0 %v400
    %448 = vmatpush.msra.mxu0 %v399
    %449 = vmatpush.msra.mxu0 %v398
    %450 = vmatpush.msra.mxu0 %v397
    %451 = vmatpush.msra.mxu0 %v396
    %452 = vmatmul.f32.gmra.mxu0 %v379
    %v453 = vpop.f32.mrf.mxu0
    %v454 = vadd.f32 %v434, %v453
    %455 = vdwg.mxu0
    %v456 = vxor.u32 %v454, 2147483648
    %v457 = vmul.f32 %v456, 1.442695
    %v458 = vpow.pop %v457
    %v459 = vadd.f32 %v458, 1.0
    %v460 = vrcp.pop %v459
    %v461 = vmul.f32 %v459, %v460
    %v462 = vsub.f32 1.0, %v461
    %v463 = vmul.f32 %v460, %v462
    %v464 = vadd.f32 %v460, %v463
    %vm465 = vweird.f32 %v459
    %vm466 = vweird.f32 %v460
    %vm467 = vmor %vm465, %vm466
    %v468 = vsel %vm467, %v460, %v464
    %v469 = vand.u32 2147483647, %v459
    %vm470 = vcmp.eq.f32.partialorder %v469, 8.507059e+37
    %v471 = vand.u32 %v459, 2147483648
    %v472 = vor.u32 1.1754944e-38, %v471
    %v473 = vsel %vm470, %v472, %v468
    %v474 = vmul.f32 1.0, %v473
    %v475 = vmul.f32 %v454, %v474
    %v476 = vld [vmem:[#allocation6] sm:$0xff]
    %v477 = vld [vmem:[#allocation6 + $0x8] sm:$0xff]
    %v478 = vld [vmem:[#allocation6 + $0x10] sm:$0xff]
    %v479 = vld [vmem:[#allocation6 + $0x18] sm:$0xff]
    %v480 = vld [vmem:[#allocation6 + $0x20] sm:$0xff]
    %v481 = vld [vmem:[#allocation6 + $0x28] sm:$0xff]
    %v482 = vld [vmem:[#allocation6 + $0x30] sm:$0xff]
    %v483 = vld [vmem:[#allocation6 + $0x38] sm:$0xff]
    %v484 = vld [vmem:[#allocation6 + $0x40] sm:$0xff]
    %v485 = vld [vmem:[#allocation6 + $0x48] sm:$0xff]
    %v486 = vld [vmem:[#allocation6 + $0x50] sm:$0xff]
    %v487 = vld [vmem:[#allocation6 + $0x58] sm:$0xff]
    %v488 = vld [vmem:[#allocation6 + $0x60] sm:$0xff]
    %v489 = vld [vmem:[#allocation6 + $0x68] sm:$0xff]
    %v490 = vld [vmem:[#allocation6 + $0x70] sm:$0xff]
    %v491 = vld [vmem:[#allocation6 + $0x78] sm:$0xff]
    %v492 = vld [vmem:[%s5] sm:$0x1]
    %v494 = vperm.slane %v492, 0
    %496 = vmatpush.msra.mxu0 %v491
    %497 = vmatpush.msra.mxu0 %v490
    %498 = vmatpush.msra.mxu0 %v489
    %499 = vmatpush.msra.mxu0 %v488
    %500 = vmatpush.msra.mxu0 %v487
    %501 = vmatpush.msra.mxu0 %v486
    %502 = vmatpush.msra.mxu0 %v485
    %503 = vmatpush.msra.mxu0 %v484
    %504 = vmatpush.msra.mxu0 %v483
    %505 = vmatpush.msra.mxu0 %v482
    %506 = vmatpush.msra.mxu0 %v481
    %507 = vmatpush.msra.mxu0 %v480
    %508 = vmatpush.msra.mxu0 %v479
    %509 = vmatpush.msra.mxu0 %v478
    %510 = vmatpush.msra.mxu0 %v477
    %511 = vmatpush.msra.mxu0 %v476
    %512 = vmatmul.f32.gmra.mxu0 %v475
    %v513 = vpop.f32.mrf.mxu0
    %v514 = vadd.f32 %v494, %v513
    %515 = vdwg.mxu0
    %516 = vst [vmem:[#allocation8] sm:$0xff] %v514
    // Predicated region
    $region34: #{tpu_custom_call.1} parent=1 // pred_check
      _
    $region35: #{tpu_custom_call.1} parent=1 // pred_check_branch
      %518 = sbr.rel (0) target = $region37
    $region36: #{tpu_custom_call.1} parent=1 // pred_region
      %520 = vsyncadd [#allocation5], 0
      %s522 = sshll.u32 [#allocation8], 4
      %s523 = int_to_ptr.vmem [resolvable:$true] %s522
      %s524 = sshll.u32 %s6, 4
      %s525 = int_to_ptr.hbm [resolvable:$true] %s524
      %527 = dma.vmem_to_hbm [thread:$0]  %s523, 128, %s525, [#allocation5]
    $region37: #{tpu_custom_call.1} parent=1 // pred_fallthru
      _
    // Predicated region
    $region38: #{tpu_custom_call.1} parent=1 // pred_check
      _
    $region39: #{tpu_custom_call.1} parent=1 // pred_check_branch
      %529 = sbr.rel (0) target = $region41
    $region40: #{tpu_custom_call.1} parent=1 // pred_region
      %531 = dma.done [#allocation5], 128
    $region41: #{tpu_custom_call.1} parent=1 // pred_fallthru
      _
    %532 = vsyncpa [#allocation4], 1
    %533 = vsyncpa [#allocation7], 1
    %534 = vsyncpa [#allocation5], 1

</llo_original>
